<compile_context>
chip_gen: v5e
topology: v5e:2x2
jax: 0.10.0
libtpu: 0.0.40
codegen_flags: <defaults>
</compile_context>

<pallas_src>
import functools

import jax
import jax.numpy as jnp
from jax import lax
from jax.experimental import pallas as pl
from jax.experimental.pallas import tpu as pltpu


def _round_up(x, m):
    return (x + m - 1) // m * m


def _bottleneck_kernel(x_ref, mask_ref, w1_ref, s1_ref, b1_ref,
                       w2_ref, s2_ref, b2_ref, o_ref, hslab, colslab,
                       *, H, W, ml, use_add):
    # x_ref   : (1, C_in, HW)    dense spatial-in-lanes input image
    # mask_ref: (2, HW)          column masks: [0] kills w==0, [1] kills w==W-1
    # w1_ref  : (C_hp, C_in)     1x1 conv weight (hidden dim zero-padded)
    # s1/b1   : (C_hp, 1)        folded BN1 scale / bias
    # w2_ref  : (C_out, 9*C_hp)  3x3 conv weight, [o, (dy*3+dx)*C_hp + c]
    # s2/b2   : (C_out, 1)       folded BN2 scale / bias
    # o_ref   : (1, C_out, HW)   dense output image
    # hslab   : VMEM (C_hp, Lh)  zero-margined hidden activation
    # colslab : VMEM (9*C_hp, HW) im2col slab for the stacked-K conv2 matmul
    HW = H * W
    C_hp = hslab.shape[0]
    Lh = hslab.shape[1]

    # ---- conv1 (1x1) + BN1 + SiLU, dense layout -> interior of hslab ----
    h = jnp.dot(w1_ref[...], x_ref[0], preferred_element_type=jnp.float32)
    h = h * s1_ref[...] + b1_ref[...]
    h = h * jax.nn.sigmoid(h)
    # Zero margins provide conv2's top/bottom zero padding (re-zeroed every
    # step: under "parallel" sharding each core owns its own scratch copy).
    hslab[:, :ml] = jnp.zeros((C_hp, ml), jnp.float32)
    hslab[:, ml + HW:] = jnp.zeros((C_hp, Lh - ml - HW), jnp.float32)
    hslab[:, ml:ml + HW] = h

    # ---- build im2col slab: 9 lane-shifted (+ column-masked) copies ----
    m_left = mask_ref[0:1, :]    # 0 where w == 0     (needed for dx == 0 taps)
    m_right = mask_ref[1:2, :]   # 0 where w == W - 1 (needed for dx == 2 taps)
    for dy in range(3):
        for dx in range(3):
            t = dy * 3 + dx
            off = ml + (dy - 1) * W + (dx - 1)        # static lane offset
            blk = hslab[:, off:off + HW]
            if dx == 0:
                blk = blk * m_left
            elif dx == 2:
                blk = blk * m_right
            colslab[t * C_hp:(t + 1) * C_hp, :] = blk

    # ---- conv2 (3x3) as ONE stacked-K matmul + BN2 + SiLU (+ residual) ----
    y = jnp.dot(w2_ref[...], colslab[...], preferred_element_type=jnp.float32)
    y = y * s2_ref[...] + b2_ref[...]
    y = y * jax.nn.sigmoid(y)
    if use_add:
        y = y + x_ref[0]                              # re-read from VMEM
    o_ref[0] = y.astype(o_ref.dtype)


@functools.partial(jax.jit, static_argnames=("use_add",))
def bottleneck_forward(x, w1, s1, b1, w2, s2, b2, *, use_add=True):
    """Bottleneck.forward (depthwise=False), eval-mode BN folded into scale/bias.

    x  : (N, C_in, H, W) f32 (NCHW, PyTorch layout)
    w1 : (C_h, C_in)        conv1 1x1 weight (squeezed)
    s1 : (C_h,)  b1: (C_h,)   folded BN1 scale/bias
    w2 : (C_out, C_h, 3, 3) conv2 3x3 weight
    s2 : (C_out,) b2: (C_out,) folded BN2 scale/bias
    returns (N, C_out, H, W) f32
    """
    N, C_in, H, W = x.shape
    C_h = w1.shape[0]
    C_out = w2.shape[0]
    if use_add:
        assert C_in == C_out, "residual requires in_channels == out_channels"

    HW = H * W
    C_hp = _round_up(C_h, 8)             # sublane-aligned hidden channels
    ml = _round_up(W + 1, 128)           # left zero margin (>= W+1), lane-aligned
    Lh = _round_up(ml + HW + W + 1, 128)

    # Dense spatial-in-lanes layout; contiguous reshape, no HBM copy.
    x_flat = x.reshape(N, C_in, HW)

    # Zero-pad the hidden dim (exact: pad channels are 0 end-to-end).
    w1p = jnp.pad(w1, ((0, C_hp - C_h), (0, 0)))
    s1p = jnp.pad(s1, (0, C_hp - C_h)).reshape(C_hp, 1)
    b1p = jnp.pad(b1, (0, C_hp - C_h)).reshape(C_hp, 1)
    w2p = jnp.pad(w2, ((0, 0), (0, C_hp - C_h), (0, 0), (0, 0)))
    # (C_out, C_hp, 3, 3) -> (C_out, 9*C_hp), index [o, (dy*3+dx)*C_hp + c].
    w2_flat = jnp.transpose(w2p, (0, 2, 3, 1)).reshape(C_out, 9 * C_hp)

    # Column masks for dx=0 / dx=2 taps (row-edge wraps in the flat layout).
    col = jnp.arange(HW, dtype=jnp.int32) % W
    mask = jnp.stack([col != 0, col != W - 1]).astype(jnp.float32)   # (2, HW)

    kernel = functools.partial(_bottleneck_kernel, H=H, W=W, ml=ml,
                               use_add=use_add)

    # VMEM budget (bytes): double-buffered in/out blocks + scratch + weights.
    est = 4 * (2 * C_in * HW + 2 * C_out * HW + 2 * 2 * HW
               + C_hp * Lh + 9 * C_hp * HW
               + C_hp * C_in + 9 * C_hp * C_out + 2 * C_hp + 2 * C_out)
    vmem_limit = int(min(max(2 * est, 16 * 1024 * 1024), 56 * 1024 * 1024))

    out_flat = pl.pallas_call(
        kernel,
        out_shape=jax.ShapeDtypeStruct((N, C_out, HW), jnp.float32),
        grid_spec=pltpu.PrefetchScalarGridSpec(
            num_scalar_prefetch=0,
            grid=(N,),
            in_specs=[
                pl.BlockSpec((1, C_in, HW), lambda n: (n, 0, 0)),     # x (dense)
                pl.BlockSpec((2, HW), lambda n: (0, 0)),              # col masks
                pl.BlockSpec((C_hp, C_in), lambda n: (0, 0)),         # w1
                pl.BlockSpec((C_hp, 1), lambda n: (0, 0)),            # BN1 scale
                pl.BlockSpec((C_hp, 1), lambda n: (0, 0)),            # BN1 bias
                pl.BlockSpec((C_out, 9 * C_hp), lambda n: (0, 0)),    # w2 stacked
                pl.BlockSpec((C_out, 1), lambda n: (0, 0)),           # BN2 scale
                pl.BlockSpec((C_out, 1), lambda n: (0, 0)),           # BN2 bias
            ],
            out_specs=pl.BlockSpec((1, C_out, HW), lambda n: (n, 0, 0)),
            scratch_shapes=[pltpu.VMEM((C_hp, Lh), jnp.float32),
                            pltpu.VMEM((9 * C_hp, HW), jnp.float32)],
        ),
        compiler_params=pltpu.CompilerParams(
            dimension_semantics=("parallel",),      # batches shard across TCs
            vmem_limit_bytes=vmem_limit,
        ),
    )(x_flat, mask, w1p, s1p, b1p, w2_flat,
      s2.reshape(C_out, 1), b2.reshape(C_out, 1))

    # Contiguous reshape back to NCHW (free, no copy).
    return out_flat.reshape(N, C_out, H, W)


def _reference(x, w1, s1, b1, w2, s2, b2, use_add):
    """Pure-JAX reference (XLA convs) for correctness checking."""
    dn = ("NCHW", "OIHW", "NCHW")
    h = lax.conv_general_dilated(x, w1[:, :, None, None], (1, 1), "VALID",
                                 dimension_numbers=dn)
    h = h * s1[None, :, None, None] + b1[None, :, None, None]
    h = h * jax.nn.sigmoid(h)
    y = lax.conv_general_dilated(h, w2, (1, 1), ((1, 1), (1, 1)),
                                 dimension_numbers=dn)
    y = y * s2[None, :, None, None] + b2[None, :, None, None]
    y = y * jax.nn.sigmoid(y)
    if use_add:
        y = y + x
    return y


if __name__ == "__main__":
    key = jax.random.PRNGKey(0)
    N, C_in, H, W = 2, 8, 16, 16
    C_out = 8                       # shortcut path requires in == out
    expansion = 0.5
    C_h = int(C_out * expansion)    # hidden_channels = 4 (padded to 8 inside)
    use_add = True                  # shortcut and in_channels == out_channels

    ks = jax.random.split(key, 11)
    x = jax.random.normal(ks[0], (N, C_in, H, W), dtype=jnp.float32)

    # conv1: Conv2d(C_in, C_h, 1, bias=False); conv2: Conv2d(C_h, C_out, 3, pad=1, bias=False)
    w1 = 0.1 * jax.random.normal(ks[1], (C_h, C_in), dtype=jnp.float32)
    w2 = 0.1 * jax.random.normal(ks[2], (C_out, C_h, 3, 3), dtype=jnp.float32)

    # BatchNorm2d params (eval mode), folded into scale/bias.
    eps = 1e-5
    g1 = 1.0 + 0.1 * jax.random.normal(ks[3], (C_h,), dtype=jnp.float32)
    be1 = 0.1 * jax.random.normal(ks[4], (C_h,), dtype=jnp.float32)
    mu1 = 0.1 * jax.random.normal(ks[5], (C_h,), dtype=jnp.float32)
    v1 = jnp.abs(jax.random.normal(ks[6], (C_h,), dtype=jnp.float32)) + 0.5
    s1 = g1 / jnp.sqrt(v1 + eps)
    b1 = be1 - mu1 * s1

    g2 = 1.0 + 0.1 * jax.random.normal(ks[7], (C_out,), dtype=jnp.float32)
    be2 = 0.1 * jax.random.normal(ks[8], (C_out,), dtype=jnp.float32)
    mu2 = 0.1 * jax.random.normal(ks[9], (C_out,), dtype=jnp.float32)
    v2 = jnp.abs(jax.random.normal(ks[10], (C_out,), dtype=jnp.float32)) + 0.5
    s2 = g2 / jnp.sqrt(v2 + eps)
    b2 = be2 - mu2 * s2

    out = bottleneck_forward(x, w1, s1, b1, w2, s2, b2, use_add=use_add)
    out = jax.block_until_ready(out)

    ref = _reference(x, w1, s1, b1, w2, s2, b2, use_add)
    assert out.shape == (N, C_out, H, W)
    err = float(jnp.max(jnp.abs(out - ref)))
    assert jnp.allclose(out, ref, atol=1e-4, rtol=1e-4), err

    print("KERNEL_OK")
</pallas_src>

<mosaic_0001>
module attributes {stable_mosaic.version = 11 : i64} {
  func.func @_bottleneck_kernel(%arg0: i32, %arg1: memref<1x8x256xf32, #tpu.memory_space<vmem>>, %arg2: memref<2x256xf32, #tpu.memory_space<vmem>>, %arg3: memref<8x8xf32, #tpu.memory_space<vmem>>, %arg4: memref<8x1xf32, #tpu.memory_space<vmem>>, %arg5: memref<8x1xf32, #tpu.memory_space<vmem>>, %arg6: memref<8x72xf32, #tpu.memory_space<vmem>>, %arg7: memref<8x1xf32, #tpu.memory_space<vmem>>, %arg8: memref<8x1xf32, #tpu.memory_space<vmem>>, %arg9: memref<1x8x256xf32, #tpu.memory_space<vmem>>, %arg10: memref<8x512xf32, #tpu.memory_space<vmem>>, %arg11: memref<72x256xf32, #tpu.memory_space<vmem>>) attributes {dimension_semantics = [#tpu.dimension_semantics<parallel>], iteration_bounds = array<i64: 2>, scalar_prefetch = 0 : i64, scratch_operands = 2 : i64, tpu.core_type = #tpu.core_type<tc>, window_params = [{transform_indices = @transform_0, window_bounds = array<i64: 1, 8, 256>}, {pipeline_mode = #tpu.pipeline_mode<synchronous>, transform_indices = @transform_1, window_bounds = array<i64: 2, 256>}, {pipeline_mode = #tpu.pipeline_mode<synchronous>, transform_indices = @transform_2, window_bounds = array<i64: 8, 8>}, {pipeline_mode = #tpu.pipeline_mode<synchronous>, transform_indices = @transform_3, window_bounds = array<i64: 8, 1>}, {pipeline_mode = #tpu.pipeline_mode<synchronous>, transform_indices = @transform_4, window_bounds = array<i64: 8, 1>}, {pipeline_mode = #tpu.pipeline_mode<synchronous>, transform_indices = @transform_5, window_bounds = array<i64: 8, 72>}, {pipeline_mode = #tpu.pipeline_mode<synchronous>, transform_indices = @transform_6, window_bounds = array<i64: 8, 1>}, {pipeline_mode = #tpu.pipeline_mode<synchronous>, transform_indices = @transform_7, window_bounds = array<i64: 8, 1>}, {transform_indices = @transform_8, window_bounds = array<i64: 1, 8, 256>}]} {
    %c0 = arith.constant 0 : index
    %c0_0 = arith.constant 0 : index
    %0 = vector.load %arg3[%c0, %c0_0] : memref<8x8xf32, #tpu.memory_space<vmem>>, vector<8x8xf32>
    %c0_1 = arith.constant 0 : index
    %c0_2 = arith.constant 0 : index
    %c0_3 = arith.constant 0 : index
    %1 = vector.load %arg1[%c0_1, %c0_2, %c0_3] : memref<1x8x256xf32, #tpu.memory_space<vmem>>, vector<1x8x256xf32>
    %2 = vector.shape_cast %1 : vector<1x8x256xf32> to vector<8x256xf32>
    %cst = arith.constant dense<0.000000e+00> : vector<8x256xf32>
    %3 = tpu.matmul %0, %2, %cst {dimension_numbers = #tpu.dot_dimension_numbers<[1], [0], [0], [1], [0, 0, 1, 1], [], []>} : vector<8x8xf32>, vector<8x256xf32>, vector<8x256xf32> -> vector<8x256xf32>
    %c0_4 = arith.constant 0 : index
    %c0_5 = arith.constant 0 : index
    %4 = vector.load %arg4[%c0_4, %c0_5] : memref<8x1xf32, #tpu.memory_space<vmem>>, vector<8x1xf32>
    %5 = vector.broadcast %4 : vector<8x1xf32> to vector<8x256xf32>
    %6 = arith.mulf %3, %5 : vector<8x256xf32>
    %c0_6 = arith.constant 0 : index
    %c0_7 = arith.constant 0 : index
    %7 = vector.load %arg5[%c0_6, %c0_7] : memref<8x1xf32, #tpu.memory_space<vmem>>, vector<8x1xf32>
    %8 = vector.broadcast %7 : vector<8x1xf32> to vector<8x256xf32>
    %9 = arith.addf %6, %8 : vector<8x256xf32>
    %10 = arith.negf %9 : vector<8x256xf32>
    %11 = math.exp %10 : vector<8x256xf32>
    %cst_8 = arith.constant 1.000000e+00 : f32
    %12 = vector.broadcast %cst_8 : f32 to vector<8x256xf32>
    %13 = arith.addf %12, %11 : vector<8x256xf32>
    %14 = arith.divf %12, %13 : vector<8x256xf32>
    %15 = arith.mulf %9, %14 : vector<8x256xf32>
    %cst_9 = arith.constant 0.000000e+00 : f32
    %16 = vector.broadcast %cst_9 : f32 to vector<8x128xf32>
    %c0_10 = arith.constant 0 : index
    %c0_11 = arith.constant 0 : index
    %17 = vector.load %arg10[%c0_10, %c0_11] : memref<8x512xf32, #tpu.memory_space<vmem>>, vector<8x128xf32>
    tpu.vector_store %arg10[%c0_10, %c0_11], %16 {strides = array<i32>} : memref<8x512xf32, #tpu.memory_space<vmem>>, vector<8x128xf32>,
    %cst_12 = arith.constant 0.000000e+00 : f32
    %18 = vector.broadcast %cst_12 : f32 to vector<8x128xf32>
    %c0_13 = arith.constant 0 : index
    %c384 = arith.constant 384 : index
    %19 = vector.load %arg10[%c0_13, %c384] : memref<8x512xf32, #tpu.memory_space<vmem>>, vector<8x128xf32>
    tpu.vector_store %arg10[%c0_13, %c384], %18 {strides = array<i32>} : memref<8x512xf32, #tpu.memory_space<vmem>>, vector<8x128xf32>,
    %c0_14 = arith.constant 0 : index
    %c128 = arith.constant 128 : index
    %20 = vector.load %arg10[%c0_14, %c128] : memref<8x512xf32, #tpu.memory_space<vmem>>, vector<8x256xf32>
    tpu.vector_store %arg10[%c0_14, %c128], %15 {strides = array<i32>} : memref<8x512xf32, #tpu.memory_space<vmem>>, vector<8x256xf32>,
    %c0_15 = arith.constant 0 : index
    %c0_16 = arith.constant 0 : index
    %21 = vector.load %arg2[%c0_15, %c0_16] : memref<2x256xf32, #tpu.memory_space<vmem>>, vector<1x256xf32>
    %c1 = arith.constant 1 : index
    %c0_17 = arith.constant 0 : index
    %22 = vector.load %arg2[%c1, %c0_17] : memref<2x256xf32, #tpu.memory_space<vmem>>, vector<1x256xf32>
    %c0_18 = arith.constant 0 : index
    %c111 = arith.constant 111 : index
    %23 = vector.load %arg10[%c0_18, %c111] : memref<8x512xf32, #tpu.memory_space<vmem>>, vector<8x256xf32>
    %24 = vector.broadcast %21 : vector<1x256xf32> to vector<8x256xf32>
    %25 = arith.mulf %23, %24 : vector<8x256xf32>
    %c0_19 = arith.constant 0 : index
    %c0_20 = arith.constant 0 : index
    %26 = vector.load %arg11[%c0_19, %c0_20] : memref<72x256xf32, #tpu.memory_space<vmem>>, vector<8x256xf32>
    tpu.vector_store %arg11[%c0_19, %c0_20], %25 {strides = array<i32>} : memref<72x256xf32, #tpu.memory_space<vmem>>, vector<8x256xf32>,
    %c0_21 = arith.constant 0 : index
    %c112 = arith.constant 112 : index
    %27 = vector.load %arg10[%c0_21, %c112] : memref<8x512xf32, #tpu.memory_space<vmem>>, vector<8x256xf32>
    %c8 = arith.constant 8 : index
    %c0_22 = arith.constant 0 : index
    %28 = vector.load %arg11[%c8, %c0_22] : memref<72x256xf32, #tpu.memory_space<vmem>>, vector<8x256xf32>
    tpu.vector_store %arg11[%c8, %c0_22], %27 {strides = array<i32>} : memref<72x256xf32, #tpu.memory_space<vmem>>, vector<8x256xf32>,
    %c0_23 = arith.constant 0 : index
    %c113 = arith.constant 113 : index
    %29 = vector.load %arg10[%c0_23, %c113] : memref<8x512xf32, #tpu.memory_space<vmem>>, vector<8x256xf32>
    %30 = vector.broadcast %22 : vector<1x256xf32> to vector<8x256xf32>
    %31 = arith.mulf %29, %30 : vector<8x256xf32>
    %c16 = arith.constant 16 : index
    %c0_24 = arith.constant 0 : index
    %32 = vector.load %arg11[%c16, %c0_24] : memref<72x256xf32, #tpu.memory_space<vmem>>, vector<8x256xf32>
    tpu.vector_store %arg11[%c16, %c0_24], %31 {strides = array<i32>} : memref<72x256xf32, #tpu.memory_space<vmem>>, vector<8x256xf32>,
    %c0_25 = arith.constant 0 : index
    %c127 = arith.constant 127 : index
    %33 = vector.load %arg10[%c0_25, %c127] : memref<8x512xf32, #tpu.memory_space<vmem>>, vector<8x256xf32>
    %34 = vector.broadcast %21 : vector<1x256xf32> to vector<8x256xf32>
    %35 = arith.mulf %33, %34 : vector<8x256xf32>
    %c24 = arith.constant 24 : index
    %c0_26 = arith.constant 0 : index
    %36 = vector.load %arg11[%c24, %c0_26] : memref<72x256xf32, #tpu.memory_space<vmem>>, vector<8x256xf32>
    tpu.vector_store %arg11[%c24, %c0_26], %35 {strides = array<i32>} : memref<72x256xf32, #tpu.memory_space<vmem>>, vector<8x256xf32>,
    %c0_27 = arith.constant 0 : index
    %c128_28 = arith.constant 128 : index
    %37 = vector.load %arg10[%c0_27, %c128_28] : memref<8x512xf32, #tpu.memory_space<vmem>>, vector<8x256xf32>
    %c32 = arith.constant 32 : index
    %c0_29 = arith.constant 0 : index
    %38 = vector.load %arg11[%c32, %c0_29] : memref<72x256xf32, #tpu.memory_space<vmem>>, vector<8x256xf32>
    tpu.vector_store %arg11[%c32, %c0_29], %37 {strides = array<i32>} : memref<72x256xf32, #tpu.memory_space<vmem>>, vector<8x256xf32>,
    %c0_30 = arith.constant 0 : index
    %c129 = arith.constant 129 : index
    %39 = vector.load %arg10[%c0_30, %c129] : memref<8x512xf32, #tpu.memory_space<vmem>>, vector<8x256xf32>
    %40 = vector.broadcast %22 : vector<1x256xf32> to vector<8x256xf32>
    %41 = arith.mulf %39, %40 : vector<8x256xf32>
    %c40 = arith.constant 40 : index
    %c0_31 = arith.constant 0 : index
    %42 = vector.load %arg11[%c40, %c0_31] : memref<72x256xf32, #tpu.memory_space<vmem>>, vector<8x256xf32>
    tpu.vector_store %arg11[%c40, %c0_31], %41 {strides = array<i32>} : memref<72x256xf32, #tpu.memory_space<vmem>>, vector<8x256xf32>,
    %c0_32 = arith.constant 0 : index
    %c143 = arith.constant 143 : index
    %43 = vector.load %arg10[%c0_32, %c143] : memref<8x512xf32, #tpu.memory_space<vmem>>, vector<8x256xf32>
    %44 = vector.broadcast %21 : vector<1x256xf32> to vector<8x256xf32>
    %45 = arith.mulf %43, %44 : vector<8x256xf32>
    %c48 = arith.constant 48 : index
    %c0_33 = arith.constant 0 : index
    %46 = vector.load %arg11[%c48, %c0_33] : memref<72x256xf32, #tpu.memory_space<vmem>>, vector<8x256xf32>
    tpu.vector_store %arg11[%c48, %c0_33], %45 {strides = array<i32>} : memref<72x256xf32, #tpu.memory_space<vmem>>, vector<8x256xf32>,
    %c0_34 = arith.constant 0 : index
    %c144 = arith.constant 144 : index
    %47 = vector.load %arg10[%c0_34, %c144] : memref<8x512xf32, #tpu.memory_space<vmem>>, vector<8x256xf32>
    %c56 = arith.constant 56 : index
    %c0_35 = arith.constant 0 : index
    %48 = vector.load %arg11[%c56, %c0_35] : memref<72x256xf32, #tpu.memory_space<vmem>>, vector<8x256xf32>
    tpu.vector_store %arg11[%c56, %c0_35], %47 {strides = array<i32>} : memref<72x256xf32, #tpu.memory_space<vmem>>, vector<8x256xf32>,
    %c0_36 = arith.constant 0 : index
    %c145 = arith.constant 145 : index
    %49 = vector.load %arg10[%c0_36, %c145] : memref<8x512xf32, #tpu.memory_space<vmem>>, vector<8x256xf32>
    %50 = vector.broadcast %22 : vector<1x256xf32> to vector<8x256xf32>
    %51 = arith.mulf %49, %50 : vector<8x256xf32>
    %c64 = arith.constant 64 : index
    %c0_37 = arith.constant 0 : index
    %52 = vector.load %arg11[%c64, %c0_37] : memref<72x256xf32, #tpu.memory_space<vmem>>, vector<8x256xf32>
    tpu.vector_store %arg11[%c64, %c0_37], %51 {strides = array<i32>} : memref<72x256xf32, #tpu.memory_space<vmem>>, vector<8x256xf32>,
    %c0_38 = arith.constant 0 : index
    %c0_39 = arith.constant 0 : index
    %53 = vector.load %arg6[%c0_38, %c0_39] : memref<8x72xf32, #tpu.memory_space<vmem>>, vector<8x72xf32>
    %c0_40 = arith.constant 0 : index
    %c0_41 = arith.constant 0 : index
    %54 = vector.load %arg11[%c0_40, %c0_41] : memref<72x256xf32, #tpu.memory_space<vmem>>, vector<72x256xf32>
    %cst_42 = arith.constant dense<0.000000e+00> : vector<8x256xf32>
    %55 = tpu.matmul %53, %54, %cst_42 {dimension_numbers = #tpu.dot_dimension_numbers<[1], [0], [0], [1], [0, 0, 1, 1], [], []>} : vector<8x72xf32>, vector<72x256xf32>, vector<8x256xf32> -> vector<8x256xf32>
    %c0_43 = arith.constant 0 : index
    %c0_44 = arith.constant 0 : index
    %56 = vector.load %arg7[%c0_43, %c0_44] : memref<8x1xf32, #tpu.memory_space<vmem>>, vector<8x1xf32>
    %57 = vector.broadcast %56 : vector<8x1xf32> to vector<8x256xf32>
    %58 = arith.mulf %55, %57 : vector<8x256xf32>
    %c0_45 = arith.constant 0 : index
    %c0_46 = arith.constant 0 : index
    %59 = vector.load %arg8[%c0_45, %c0_46] : memref<8x1xf32, #tpu.memory_space<vmem>>, vector<8x1xf32>
    %60 = vector.broadcast %59 : vector<8x1xf32> to vector<8x256xf32>
    %61 = arith.addf %58, %60 : vector<8x256xf32>
    %62 = arith.negf %61 : vector<8x256xf32>
    %63 = math.exp %62 : vector<8x256xf32>
    %cst_47 = arith.constant 1.000000e+00 : f32
    %64 = vector.broadcast %cst_47 : f32 to vector<8x256xf32>
    %65 = arith.addf %64, %63 : vector<8x256xf32>
    %66 = arith.divf %64, %65 : vector<8x256xf32>
    %67 = arith.mulf %61, %66 : vector<8x256xf32>
    %c0_48 = arith.constant 0 : index
    %c0_49 = arith.constant 0 : index
    %c0_50 = arith.constant 0 : index
    %68 = vector.load %arg1[%c0_48, %c0_49, %c0_50] : memref<1x8x256xf32, #tpu.memory_space<vmem>>, vector<1x8x256xf32>
    %69 = vector.shape_cast %68 : vector<1x8x256xf32> to vector<8x256xf32>
    %70 = arith.addf %67, %69 : vector<8x256xf32>
    %c0_51 = arith.constant 0 : index
    %c0_52 = arith.constant 0 : index
    %c0_53 = arith.constant 0 : index
    %71 = vector.load %arg9[%c0_51, %c0_52, %c0_53] : memref<1x8x256xf32, #tpu.memory_space<vmem>>, vector<1x8x256xf32>
    %72 = vector.shape_cast %71 : vector<1x8x256xf32> to vector<8x256xf32>
    %73 = vector.shape_cast %70 : vector<8x256xf32> to vector<1x8x256xf32>
    tpu.vector_store %arg9[%c0_51, %c0_52, %c0_53], %73 {strides = array<i32>} : memref<1x8x256xf32, #tpu.memory_space<vmem>>, vector<1x8x256xf32>,
    return
  }
  func.func @transform_0(%arg0: i32) -> (i32, i32, i32) {
    %c0_i32 = arith.constant 0 : i32
    %c0_i32_0 = arith.constant 0 : i32
    %c0_i32_1 = arith.constant 0 : i32
    return %arg0, %c0_i32, %c0_i32_0 : i32, i32, i32
  }
  func.func @transform_1(%arg0: i32) -> (i32, i32) {
    %c0_i32 = arith.constant 0 : i32
    %c0_i32_0 = arith.constant 0 : i32
    %c0_i32_1 = arith.constant 0 : i32
    return %c0_i32, %c0_i32_0 : i32, i32
  }
  func.func @transform_2(%arg0: i32) -> (i32, i32) {
    %c0_i32 = arith.constant 0 : i32
    %c0_i32_0 = arith.constant 0 : i32
    %c0_i32_1 = arith.constant 0 : i32
    return %c0_i32, %c0_i32_0 : i32, i32
  }
  func.func @transform_3(%arg0: i32) -> (i32, i32) {
    %c0_i32 = arith.constant 0 : i32
    %c0_i32_0 = arith.constant 0 : i32
    %c0_i32_1 = arith.constant 0 : i32
    return %c0_i32, %c0_i32_0 : i32, i32
  }
  func.func @transform_4(%arg0: i32) -> (i32, i32) {
    %c0_i32 = arith.constant 0 : i32
    %c0_i32_0 = arith.constant 0 : i32
    %c0_i32_1 = arith.constant 0 : i32
    return %c0_i32, %c0_i32_0 : i32, i32
  }
  func.func @transform_5(%arg0: i32) -> (i32, i32) {
    %c0_i32 = arith.constant 0 : i32
    %c0_i32_0 = arith.constant 0 : i32
    %c0_i32_1 = arith.constant 0 : i32
    return %c0_i32, %c0_i32_0 : i32, i32
  }
  func.func @transform_6(%arg0: i32) -> (i32, i32) {
    %c0_i32 = arith.constant 0 : i32
    %c0_i32_0 = arith.constant 0 : i32
    %c0_i32_1 = arith.constant 0 : i32
    return %c0_i32, %c0_i32_0 : i32, i32
  }
  func.func @transform_7(%arg0: i32) -> (i32, i32) {
    %c0_i32 = arith.constant 0 : i32
    %c0_i32_0 = arith.constant 0 : i32
    %c0_i32_1 = arith.constant 0 : i32
    return %c0_i32, %c0_i32_0 : i32, i32
  }
  func.func @transform_8(%arg0: i32) -> (i32, i32, i32) {
    %c0_i32 = arith.constant 0 : i32
    %c0_i32_0 = arith.constant 0 : i32
    %c0_i32_1 = arith.constant 0 : i32
    return %arg0, %c0_i32, %c0_i32_0 : i32, i32, i32
  }
}

</mosaic_0001>

<llo_original>
// kernel: bottleneck_forward.1
$region0: #{bottleneck_forward.1}
  #allocation0 [shape = 'u32[]', space=smem, size = 0x4, offset = 0x4, fixed_abs, tag = 'smem constant byte address 0x4 - core index']
  #allocation1 [shape = 'u32[72,128]{1,0:T(1,128)}', space=vmem, size = 0x9000, scoped, tag = 'internal scratch']
  #allocation2 [shape = 'f32[8,512]{1,0:T(8,128)}', space=vmem, size = 0x4000, scoped, tag = 'scratch operand']
  #allocation3 [shape = 'f32[72,256]{1,0:T(8,128)}', space=vmem, size = 0x12000, scoped, tag = 'scratch operand']
  %s0 = inlined_call_operand.vmem [shape: f32[2,8,256], index: 0, kind: input, shape index: {}]
  %s1 = inlined_call_operand.vmem [shape: f32[2,256], index: 1, kind: input, shape index: {}]
  %s2 = inlined_call_operand.vmem [shape: f32[8,8], index: 2, kind: input, shape index: {}]
  %s3 = inlined_call_operand.vmem [shape: f32[8,1], index: 3, kind: input, shape index: {}]
  %s4 = inlined_call_operand.vmem [shape: f32[8,1], index: 4, kind: input, shape index: {}]
  %s5 = inlined_call_operand.vmem [shape: f32[8,72], index: 5, kind: input, shape index: {}]
  %s6 = inlined_call_operand.vmem [shape: f32[8,1], index: 6, kind: input, shape index: {}]
  %s7 = inlined_call_operand.vmem [shape: f32[8,1], index: 7, kind: input, shape index: {}]
  %s8 = inlined_call_operand.vmem [shape: f32[2,8,256], index: 8, kind: output, shape index: {}]
  %s9 = sld [smem:[#allocation0]]
  $region65: #{bottleneck_forward.1} parent=0
    _
  %s11 = ssub.s32 1, %s9
  %s12 = scalar_select 0, %s11, %s9
  loop: start=0, step=1, limit=4
  $region2: #{bottleneck_forward.1} parent=0 // loop_pre_header
    _
  $region3: #{bottleneck_forward.1} parent=0 // loop_header
    %s14 = sphi 0, %s18
    %p15 = scmp.ge.s32.totalorder %s14, 4
    %s24 = sphi 0, %s26
    %s27 = sphi 0, %s24
    %s28 = sphi 0, %s27
    %s44 = sphi 0, %s28
    %s48 = sphi 0, %s48
    %s50 = sphi 0, %s48
    %s51 = sphi 0, %s50
    %s65 = sphi 0, %s51
    %s69 = sphi 0, %s69
    %s71 = sphi 0, %s69
    %s72 = sphi 0, %s71
    %s86 = sphi 0, %s72
    %s90 = sphi 0, %s90
    %s92 = sphi 0, %s90
    %s93 = sphi 0, %s92
    %s107 = sphi 0, %s93
    %s111 = sphi 0, %s111
    %s113 = sphi 0, %s111
    %s114 = sphi 0, %s113
    %s128 = sphi 0, %s114
    %s132 = sphi 0, %s132
    %s134 = sphi 0, %s132
    %s135 = sphi 0, %s134
    %s149 = sphi 0, %s135
    %s153 = sphi 0, %s153
    %s155 = sphi 0, %s153
    %s156 = sphi 0, %s155
    %s170 = sphi 0, %s156
    %s174 = sphi 0, %s174
    %s176 = sphi 0, %s174
    %s177 = sphi 0, %s176
    %s191 = sphi 0, %s177
    %s197 = sphi 0, %s199
    %s200 = sphi 0, %s197
    %s201 = sphi 0, %s200
    %s217 = sphi 0, %s201
  $region4: #{bottleneck_forward.1} parent=0 // loop_header_branch
    %17 = sbr.rel (%p15) target = $region8
  $region5: #{bottleneck_forward.1} parent=0 // loop_body
    %s19 = ssub.s32 %s14, 1
    %s20 = ssub.s32 %s14, 2
    %s21 = sadd.s32 %s14, 1
    %s22 = ssub.s32 %s14, %s21
    %p23 = scmp.eq.s32.totalorder %s22, 0
    %s25 = sadd.s32 %s24, 1
    %s26 = scalar_select %p23, %s24, %s25
    %p29 = pneg %p23
    %p30 = scmp.eq.s32.totalorder %s14, 1
    %p31 = por %p29, %p30
    %p32 = scmp.ne.s32.totalorder %s24, %s27
    %p33 = scmp.eq.s32.totalorder %s14, 0
    %p34 = por %p32, %p33
    %p35 = scmp.ne.s32.totalorder %s24, %s27
    %p36 = scmp.eq.s32.totalorder %s19, 1
    %p37 = por %p35, %p36
    %p38 = scmp.ne.s32.totalorder %s27, %s28
    %p39 = scmp.eq.s32.totalorder %s19, 0
    %p40 = por %p38, %p39
    %p41 = scmp.ne.s32.totalorder %s27, %s28
    %p42 = scmp.eq.s32.totalorder %s20, 1
    %p43 = por %p41, %p42
    %p45 = scmp.ne.s32.totalorder %s28, %s44
    %p46 = scmp.eq.s32.totalorder %s20, 0
    %p47 = por %p45, %p46
    %s49 = sadd.s32 %s48, 1
    %p52 = scmp.eq.s32.totalorder %s14, 1
    %p53 = scmp.ne.s32.totalorder %s48, %s50
    %p54 = scmp.eq.s32.totalorder %s14, 0
    %p55 = por %p53, %p54
    %p56 = scmp.ne.s32.totalorder %s48, %s50
    %p57 = scmp.eq.s32.totalorder %s19, 1
    %p58 = por %p56, %p57
    %p59 = scmp.ne.s32.totalorder %s50, %s51
    %p60 = scmp.eq.s32.totalorder %s19, 0
    %p61 = por %p59, %p60
    %p62 = scmp.ne.s32.totalorder %s50, %s51
    %p63 = scmp.eq.s32.totalorder %s20, 1
    %p64 = por %p62, %p63
    %p66 = scmp.ne.s32.totalorder %s51, %s65
    %p67 = scmp.eq.s32.totalorder %s20, 0
    %p68 = por %p66, %p67
    %s70 = sadd.s32 %s69, 1
    %p73 = scmp.eq.s32.totalorder %s14, 1
    %p74 = scmp.ne.s32.totalorder %s69, %s71
    %p75 = scmp.eq.s32.totalorder %s14, 0
    %p76 = por %p74, %p75
    %p77 = scmp.ne.s32.totalorder %s69, %s71
    %p78 = scmp.eq.s32.totalorder %s19, 1
    %p79 = por %p77, %p78
    %p80 = scmp.ne.s32.totalorder %s71, %s72
    %p81 = scmp.eq.s32.totalorder %s19, 0
    %p82 = por %p80, %p81
    %p83 = scmp.ne.s32.totalorder %s71, %s72
    %p84 = scmp.eq.s32.totalorder %s20, 1
    %p85 = por %p83, %p84
    %p87 = scmp.ne.s32.totalorder %s72, %s86
    %p88 = scmp.eq.s32.totalorder %s20, 0
    %p89 = por %p87, %p88
    %s91 = sadd.s32 %s90, 1
    %p94 = scmp.eq.s32.totalorder %s14, 1
    %p95 = scmp.ne.s32.totalorder %s90, %s92
    %p96 = scmp.eq.s32.totalorder %s14, 0
    %p97 = por %p95, %p96
    %p98 = scmp.ne.s32.totalorder %s90, %s92
    %p99 = scmp.eq.s32.totalorder %s19, 1
    %p100 = por %p98, %p99
    %p101 = scmp.ne.s32.totalorder %s92, %s93
    %p102 = scmp.eq.s32.totalorder %s19, 0
    %p103 = por %p101, %p102
    %p104 = scmp.ne.s32.totalorder %s92, %s93
    %p105 = scmp.eq.s32.totalorder %s20, 1
    %p106 = por %p104, %p105
    %p108 = scmp.ne.s32.totalorder %s93, %s107
    %p109 = scmp.eq.s32.totalorder %s20, 0
    %p110 = por %p108, %p109
    %s112 = sadd.s32 %s111, 1
    %p115 = scmp.eq.s32.totalorder %s14, 1
    %p116 = scmp.ne.s32.totalorder %s111, %s113
    %p117 = scmp.eq.s32.totalorder %s14, 0
    %p118 = por %p116, %p117
    %p119 = scmp.ne.s32.totalorder %s111, %s113
    %p120 = scmp.eq.s32.totalorder %s19, 1
    %p121 = por %p119, %p120
    %p122 = scmp.ne.s32.totalorder %s113, %s114
    %p123 = scmp.eq.s32.totalorder %s19, 0
    %p124 = por %p122, %p123
    %p125 = scmp.ne.s32.totalorder %s113, %s114
    %p126 = scmp.eq.s32.totalorder %s20, 1
    %p127 = por %p125, %p126
    %p129 = scmp.ne.s32.totalorder %s114, %s128
    %p130 = scmp.eq.s32.totalorder %s20, 0
    %p131 = por %p129, %p130
    %s133 = sadd.s32 %s132, 1
    %p136 = scmp.eq.s32.totalorder %s14, 1
    %p137 = scmp.ne.s32.totalorder %s132, %s134
    %p138 = scmp.eq.s32.totalorder %s14, 0
    %p139 = por %p137, %p138
    %p140 = scmp.ne.s32.totalorder %s132, %s134
    %p141 = scmp.eq.s32.totalorder %s19, 1
    %p142 = por %p140, %p141
    %p143 = scmp.ne.s32.totalorder %s134, %s135
    %p144 = scmp.eq.s32.totalorder %s19, 0
    %p145 = por %p143, %p144
    %p146 = scmp.ne.s32.totalorder %s134, %s135
    %p147 = scmp.eq.s32.totalorder %s20, 1
    %p148 = por %p146, %p147
    %p150 = scmp.ne.s32.totalorder %s135, %s149
    %p151 = scmp.eq.s32.totalorder %s20, 0
    %p152 = por %p150, %p151
    %s154 = sadd.s32 %s153, 1
    %p157 = scmp.eq.s32.totalorder %s14, 1
    %p158 = scmp.ne.s32.totalorder %s153, %s155
    %p159 = scmp.eq.s32.totalorder %s14, 0
    %p160 = por %p158, %p159
    %p161 = scmp.ne.s32.totalorder %s153, %s155
    %p162 = scmp.eq.s32.totalorder %s19, 1
    %p163 = por %p161, %p162
    %p164 = scmp.ne.s32.totalorder %s155, %s156
    %p165 = scmp.eq.s32.totalorder %s19, 0
    %p166 = por %p164, %p165
    %p167 = scmp.ne.s32.totalorder %s155, %s156
    %p168 = scmp.eq.s32.totalorder %s20, 1
    %p169 = por %p167, %p168
    %p171 = scmp.ne.s32.totalorder %s156, %s170
    %p172 = scmp.eq.s32.totalorder %s20, 0
    %p173 = por %p171, %p172
    %s175 = sadd.s32 %s174, 1
    %p178 = scmp.eq.s32.totalorder %s14, 1
    %p179 = scmp.ne.s32.totalorder %s174, %s176
    %p180 = scmp.eq.s32.totalorder %s14, 0
    %p181 = por %p179, %p180
    %p182 = scmp.ne.s32.totalorder %s174, %s176
    %p183 = scmp.eq.s32.totalorder %s19, 1
    %p184 = por %p182, %p183
    %p185 = scmp.ne.s32.totalorder %s176, %s177
    %p186 = scmp.eq.s32.totalorder %s19, 0
    %p187 = por %p185, %p186
    %p188 = scmp.ne.s32.totalorder %s176, %s177
    %p189 = scmp.eq.s32.totalorder %s20, 1
    %p190 = por %p188, %p189
    %p192 = scmp.ne.s32.totalorder %s177, %s191
    %p193 = scmp.eq.s32.totalorder %s20, 0
    %p194 = por %p192, %p193
    %s195 = ssub.s32 %s14, %s21
    %p196 = scmp.eq.s32.totalorder %s195, 0
    %s198 = sadd.s32 %s197, 1
    %s199 = scalar_select %p196, %s197, %s198
    %p202 = pneg %p196
    %p203 = scmp.eq.s32.totalorder %s14, 1
    %p204 = por %p202, %p203
    %p205 = scmp.ne.s32.totalorder %s197, %s200
    %p206 = scmp.eq.s32.totalorder %s14, 0
    %p207 = por %p205, %p206
    %p208 = scmp.ne.s32.totalorder %s197, %s200
    %p209 = scmp.eq.s32.totalorder %s19, 1
    %p210 = por %p208, %p209
    %p211 = scmp.ne.s32.totalorder %s200, %s201
    %p212 = scmp.eq.s32.totalorder %s19, 0
    %p213 = por %p211, %p212
    %p214 = scmp.ne.s32.totalorder %s200, %s201
    %p215 = scmp.eq.s32.totalorder %s20, 1
    %p216 = por %p214, %p215
    %p218 = scmp.ne.s32.totalorder %s201, %s217
    %p219 = scmp.eq.s32.totalorder %s20, 0
    %p220 = por %p218, %p219
    %p221 = scmp.le.s32.totalorder 1, %s14
    %p222 = scmp.lt.s32.totalorder %s14, 3
    %p223 = pnand %p221, %p222
    %p224 = pneg %p223
    // Predicated region
    $region9: #{bottleneck_forward.1} parent=5 // pred_check
      _
    $region10: #{bottleneck_forward.1} parent=5 // pred_check_branch
      %226 = sbr.rel (%p223) target = $region12
    $region11: #{bottleneck_forward.1} parent=5 // pred_region
      %s227 = ssub.s32 %s14, 1
      // Predicated region
      $region13: #{bottleneck_forward.1} parent=11 // pred_check
        %p228 = pneg %p61
      $region14: #{bottleneck_forward.1} parent=11 // pred_check_branch
        %230 = sbr.rel (%p228) target = $region16
      $region15: #{bottleneck_forward.1} parent=11 // pred_region
        _
      $region16: #{bottleneck_forward.1} parent=11 // pred_fallthru
        _
      // Predicated region
      $region17: #{bottleneck_forward.1} parent=11 // pred_check
        %p231 = pneg %p82
      $region18: #{bottleneck_forward.1} parent=11 // pred_check_branch
        %233 = sbr.rel (%p231) target = $region20
      $region19: #{bottleneck_forward.1} parent=11 // pred_region
        _
      $region20: #{bottleneck_forward.1} parent=11 // pred_fallthru
        _
      // Predicated region
      $region21: #{bottleneck_forward.1} parent=11 // pred_check
        %p234 = pneg %p103
      $region22: #{bottleneck_forward.1} parent=11 // pred_check_branch
        %236 = sbr.rel (%p234) target = $region24
      $region23: #{bottleneck_forward.1} parent=11 // pred_region
        _
      $region24: #{bottleneck_forward.1} parent=11 // pred_fallthru
        _
      // Predicated region
      $region25: #{bottleneck_forward.1} parent=11 // pred_check
        %p237 = pneg %p124
      $region26: #{bottleneck_forward.1} parent=11 // pred_check_branch
        %239 = sbr.rel (%p237) target = $region28
      $region27: #{bottleneck_forward.1} parent=11 // pred_region
        _
      $region28: #{bottleneck_forward.1} parent=11 // pred_fallthru
        _
      // Predicated region
      $region29: #{bottleneck_forward.1} parent=11 // pred_check
        %p240 = pneg %p145
      $region30: #{bottleneck_forward.1} parent=11 // pred_check_branch
        %242 = sbr.rel (%p240) target = $region32
      $region31: #{bottleneck_forward.1} parent=11 // pred_region
        _
      $region32: #{bottleneck_forward.1} parent=11 // pred_fallthru
        _
      // Predicated region
      $region33: #{bottleneck_forward.1} parent=11 // pred_check
        %p243 = pneg %p166
      $region34: #{bottleneck_forward.1} parent=11 // pred_check_branch
        %245 = sbr.rel (%p243) target = $region36
      $region35: #{bottleneck_forward.1} parent=11 // pred_region
        _
      $region36: #{bottleneck_forward.1} parent=11 // pred_fallthru
        _
      // Predicated region
      $region37: #{bottleneck_forward.1} parent=11 // pred_check
        %p246 = pneg %p187
      $region38: #{bottleneck_forward.1} parent=11 // pred_check_branch
        %248 = sbr.rel (%p246) target = $region40
      $region39: #{bottleneck_forward.1} parent=11 // pred_region
        _
      $region40: #{bottleneck_forward.1} parent=11 // pred_fallthru
        _
    $region12: #{bottleneck_forward.1} parent=5 // pred_fallthru
      _
    %p249 = scmp.lt.s32.totalorder %s14, 2
    // Predicated region
    $region41: #{bottleneck_forward.1} parent=5 // pred_check
      %p250 = pneg %p249
    $region42: #{bottleneck_forward.1} parent=5 // pred_check_branch
      %252 = sbr.rel (%p250) target = $region44
    $region43: #{bottleneck_forward.1} parent=5 // pred_region
      // Predicated region
      $region45: #{bottleneck_forward.1} parent=43 // pred_check
        %p253 = pneg %p34
      $region46: #{bottleneck_forward.1} parent=43 // pred_check_branch
        %255 = sbr.rel (%p253) target = $region48
      $region47: #{bottleneck_forward.1} parent=43 // pred_region
        %p256 = scmp.lt.s32.totalorder %s14, 1
        %s257 = scalar_select %p256, %s14, 1
        %s258 = smul.addr %s257, 2
        %s259 = smul.addr %s258, 8
        %s260 = scalar_lea.vmem %s0, %s259
      $region48: #{bottleneck_forward.1} parent=43 // pred_fallthru
        _
    $region44: #{bottleneck_forward.1} parent=5 // pred_fallthru
      _
    %p261 = scmp.le.s32.totalorder 1, %s14
    %p262 = scmp.lt.s32.totalorder %s14, 3
    %p263 = pnand %p261, %p262
    %p264 = pneg %p263
    // Predicated region
    $region49: #{bottleneck_forward.1} parent=5 // pred_check
      _
    $region50: #{bottleneck_forward.1} parent=5 // pred_check_branch
      %266 = sbr.rel (%p263) target = $region52
    $region51: #{bottleneck_forward.1} parent=5 // pred_region
      %s267 = ssub.s32 %s14, 1
      %p268 = scmp.lt.s32.totalorder %s19, 1
      %s269 = scalar_select %p268, %s19, 1
      %s270 = smul.addr %s269, 2
      %s271 = smul.addr %s270, 8
      %s272 = scalar_lea.vmem %s0, %s271
      %p273 = pneg %p40
      %p274 = pneg %p37
      %p275 = pneg %p61
      %p276 = pneg %p58
      %p277 = pneg %p82
      %p278 = pneg %p79
      %p279 = pneg %p103
      %p280 = pneg %p100
      %p281 = pneg %p124
      %p282 = pneg %p121
      %p283 = pneg %p145
      %p284 = pneg %p142
      %p285 = pneg %p166
      %p286 = pneg %p163
      %p287 = pneg %p187
      %p288 = pneg %p184
      %p289 = pneg %p213
      %p290 = pneg %p210
      %p291 = scmp.lt.s32.totalorder %s19, 1
      %s292 = scalar_select %p291, %s19, 1
      %s293 = smul.addr %s292, 2
      %s294 = smul.addr %s293, 8
      %s295 = scalar_lea.vmem %s8, %s294
      %p296 = scmp.lt.s32.totalorder %s19, 1
      %s297 = scalar_select %p296, %s19, 1
      %s298 = smul.addr %s297, 2
      %s299 = smul.addr %s298, 8
      %s300 = scalar_lea.vmem %s0, %s299
      %p301 = scmp.lt.s32.totalorder %s19, 1
      %s302 = scalar_select %p301, %s19, 1
      %s303 = smul.addr %s302, 2
      %s304 = smul.addr %s303, 8
      %s305 = scalar_lea.vmem %s8, %s304
      %v306 = vld [vmem:[%s2] sm:$0xff]
      %v307 = vld [vmem:[%s300] sm:$0xff]
      %v308 = vld [vmem:[%s300 + $0x8] sm:$0xff]
      %vm309 = vcmask 64512
      %v311 = vsel %vm309, %v306, 0
      %313 = vmatpush.msra.mxu0 0.0
      %314 = vmatpush.msra.mxu0 0.0
      %315 = vmatpush.msra.mxu0 0.0
      %316 = vmatpush.msra.mxu0 0.0
      %317 = vmatpush.msra.mxu0 0.0
      %318 = vmatpush.msra.mxu0 0.0
      %319 = vmatpush.msra.mxu0 0.0
      %320 = vmatpush.msra.mxu0 0.0
      %321 = vmatpush.msra.mxu0 0.0
      %322 = vmatpush.msra.mxu0 0.0
      %323 = vmatpush.msra.mxu0 0.0
      %324 = vmatpush.msra.mxu0 0.0
      %325 = vmatpush.msra.mxu0 0.0
      %326 = vmatpush.msra.mxu0 0.0
      %327 = vmatpush.msra.mxu0 0.0
      %328 = vmatpush.msra.mxu0 %v307
      %329 = vmatmul.f32.gmra.mxu0 %v311
      %v330 = vpop.f32.mrf.mxu0
      %v331 = vadd.f32 0.0, %v330
      %332 = vdwg.mxu0
      %333 = vmatpush.msra.mxu0 0.0
      %334 = vmatpush.msra.mxu0 0.0
      %335 = vmatpush.msra.mxu0 0.0
      %336 = vmatpush.msra.mxu0 0.0
      %337 = vmatpush.msra.mxu0 0.0
      %338 = vmatpush.msra.mxu0 0.0
      %339 = vmatpush.msra.mxu0 0.0
      %340 = vmatpush.msra.mxu0 0.0
      %341 = vmatpush.msra.mxu0 0.0
      %342 = vmatpush.msra.mxu0 0.0
      %343 = vmatpush.msra.mxu0 0.0
      %344 = vmatpush.msra.mxu0 0.0
      %345 = vmatpush.msra.mxu0 0.0
      %346 = vmatpush.msra.mxu0 0.0
      %347 = vmatpush.msra.mxu0 0.0
      %348 = vmatpush.msra.mxu0 %v308
      %349 = vmatmul.f32.gmra.mxu0 %v311
      %v350 = vpop.f32.mrf.mxu0
      %v351 = vadd.f32 0.0, %v350
      %352 = vdwg.mxu0
      %v353 = vld [vmem:[%s3] sm:$0xff]
      %355 = vset.pattern.permute.xlu0 0
      %356 = vperm.xlu0 %355, %v353
      %v357 = vpop.permute.xlu0 %356
      %v359 = vmul.f32 %v331, %v357
      %v360 = vmul.f32 %v351, %v357
      %v361 = vld [vmem:[%s4] sm:$0xff]
      %363 = vset.pattern.permute.xlu0 0
      %364 = vperm.xlu0 %363, %v361
      %v365 = vpop.permute.xlu0 %364
      %v367 = vadd.f32 %v359, %v365
      %v368 = vadd.f32 %v360, %v365
      %v369 = vxor.u32 %v367, 2147483648
      %v370 = vxor.u32 %v368, 2147483648
      %v371 = vmul.f32 %v369, 1.442695
      %v372 = vpow.pop %v371
      %v373 = vmul.f32 %v370, 1.442695
      %v374 = vpow.pop %v373
      %v375 = vadd.f32 %v372, 1.0
      %v376 = vadd.f32 %v374, 1.0
      %v377 = vrcp.pop %v375
      %v378 = vmul.f32 %v375, %v377
      %v379 = vsub.f32 1.0, %v378
      %v380 = vmul.f32 %v377, %v379
      %v381 = vadd.f32 %v377, %v380
      %vm382 = vweird.f32 %v375
      %vm383 = vweird.f32 %v377
      %vm384 = vmor %vm382, %vm383
      %v385 = vsel %vm384, %v377, %v381
      %v386 = vand.u32 2147483647, %v375
      %vm387 = vcmp.eq.f32.partialorder %v386, 8.507059e+37
      %v388 = vand.u32 %v375, 2147483648
      %v389 = vor.u32 1.1754944e-38, %v388
      %v390 = vsel %vm387, %v389, %v385
      %v391 = vmul.f32 1.0, %v390
      %v392 = vrcp.pop %v376
      %v393 = vmul.f32 %v376, %v392
      %v394 = vsub.f32 1.0, %v393
      %v395 = vmul.f32 %v392, %v394
      %v396 = vadd.f32 %v392, %v395
      %vm397 = vweird.f32 %v376
      %vm398 = vweird.f32 %v392
      %vm399 = vmor %vm397, %vm398
      %v400 = vsel %vm399, %v392, %v396
      %v401 = vand.u32 2147483647, %v376
      %vm402 = vcmp.eq.f32.partialorder %v401, 8.507059e+37
      %v403 = vand.u32 %v376, 2147483648
      %v404 = vor.u32 1.1754944e-38, %v403
      %v405 = vsel %vm402, %v404, %v400
      %v406 = vmul.f32 1.0, %v405
      %v407 = vmul.f32 %v367, %v391
      %v408 = vmul.f32 %v368, %v406
      %409 = vst [vmem:[#allocation2] sm:$0xff] 0.0
      %410 = vst [vmem:[#allocation2 + $0x18] sm:$0xff] 0.0
      %411 = vst [vmem:[#allocation2 + $0x8] sm:$0xff] %v407
      %412 = vst [vmem:[#allocation2 + $0x10] sm:$0xff] %v408
      %v413 = vld [vmem:[%s1] ss:$2 sm:$0x3]
      %s414 = scalar_lea.vmem %s1, 1
      %v415 = vld [vmem:[%s414] ss:$2 sm:$0x3]
      %v416 = vld [vmem:[#allocation2] sm:$0xff]
      %v417 = vld [vmem:[#allocation2 + $0x8] sm:$0xff]
      %v418 = vld [vmem:[#allocation2 + $0x10] sm:$0xff]
      %v420 = vperm.slane %v413, 0
      %v421 = vperm.slane %v413, 1
      %422 = vrot.lane.b32.xlu0 %v420, 111
      %v423 = vpop.permute.xlu0 %422
      %424 = vrot.lane.b32.xlu0 %v421, 111
      %v425 = vpop.permute.xlu0 %424
      %vm426 = vcmask 908288
      %v427 = vsel %vm426, %v423, %v425
      %v431 = vmul.f32 %v416, %v423
      %v432 = vmul.f32 %v417, %v427
      %v433 = vmul.f32 %v418, %v425
      %437 = vrot.lane.b32.xlu0 %v431, 17
      %v438 = vpop.permute.xlu0 %437
      %439 = vrot.lane.b32.xlu0 %v432, 17
      %v440 = vpop.permute.xlu0 %439
      %441 = vrot.lane.b32.xlu0 %v433, 17
      %v442 = vpop.permute.xlu0 %441
      %vm443 = vcmask 138240
      %v444 = vsel %vm443, %v438, %v440
      %v445 = vsel %vm443, %v440, %v442
      %448 = vst [vmem:[#allocation3] sm:$0xff] %v444
      %449 = vst [vmem:[#allocation3 + $0x8] sm:$0xff] %v445
      %v450 = vld [vmem:[#allocation2] sm:$0xff]
      %v451 = vld [vmem:[#allocation2 + $0x8] sm:$0xff]
      %v452 = vld [vmem:[#allocation2 + $0x10] sm:$0xff]
      %456 = vrot.lane.b32.xlu0 %v450, 16
      %v457 = vpop.permute.xlu0 %456
      %458 = vrot.lane.b32.xlu0 %v451, 16
      %v459 = vpop.permute.xlu0 %458
      %460 = vrot.lane.b32.xlu0 %v452, 16
      %v461 = vpop.permute.xlu0 %460
      %vm462 = vcmask 130048
      %v463 = vsel %vm462, %v457, %v459
      %v464 = vsel %vm462, %v459, %v461
      %467 = vst [vmem:[#allocation3 + $0x10] sm:$0xff] %v463
      %468 = vst [vmem:[#allocation3 + $0x18] sm:$0xff] %v464
      %v469 = vld [vmem:[#allocation2] sm:$0xff]
      %v470 = vld [vmem:[#allocation2 + $0x8] sm:$0xff]
      %v471 = vld [vmem:[#allocation2 + $0x10] sm:$0xff]
      %v473 = vperm.slane %v415, 0
      %v474 = vperm.slane %v415, 1
      %475 = vrot.lane.b32.xlu0 %v473, 113
      %v476 = vpop.permute.xlu0 %475
      %477 = vrot.lane.b32.xlu0 %v474, 113
      %v478 = vpop.permute.xlu0 %477
      %vm479 = vcmask 924672
      %v480 = vsel %vm479, %v476, %v478
      %v484 = vmul.f32 %v469, %v476
      %v485 = vmul.f32 %v470, %v480
      %v486 = vmul.f32 %v471, %v478
      %490 = vrot.lane.b32.xlu0 %v484, 15
      %v491 = vpop.permute.xlu0 %490
      %492 = vrot.lane.b32.xlu0 %v485, 15
      %v493 = vpop.permute.xlu0 %492
      %494 = vrot.lane.b32.xlu0 %v486, 15
      %v495 = vpop.permute.xlu0 %494
      %vm496 = vcmask 121856
      %v497 = vsel %vm496, %v491, %v493
      %v498 = vsel %vm496, %v493, %v495
      %501 = vst [vmem:[#allocation3 + $0x20] sm:$0xff] %v497
      %502 = vst [vmem:[#allocation3 + $0x28] sm:$0xff] %v498
      %v503 = vld [vmem:[#allocation2] sm:$0xff]
      %v504 = vld [vmem:[#allocation2 + $0x8] sm:$0xff]
      %v505 = vld [vmem:[#allocation2 + $0x10] sm:$0xff]
      %506 = vrot.lane.b32.xlu0 %v420, 127
      %v507 = vpop.permute.xlu0 %506
      %508 = vrot.lane.b32.xlu0 %v421, 127
      %v509 = vpop.permute.xlu0 %508
      %vm510 = vcmask 1039360
      %v511 = vsel %vm510, %v507, %v509
      %v515 = vmul.f32 %v503, %v507
      %v516 = vmul.f32 %v504, %v511
      %v517 = vmul.f32 %v505, %v509
      %521 = vrot.lane.b32.xlu0 %v515, 1
      %v522 = vpop.permute.xlu0 %521
      %523 = vrot.lane.b32.xlu0 %v516, 1
      %v524 = vpop.permute.xlu0 %523
      %525 = vrot.lane.b32.xlu0 %v517, 1
      %v526 = vpop.permute.xlu0 %525
      %vm527 = vcmask 7168
      %v528 = vsel %vm527, %v522, %v524
      %v529 = vsel %vm527, %v524, %v526
      %532 = vst [vmem:[#allocation3 + $0x30] sm:$0xff] %v528
      %533 = vst [vmem:[#allocation3 + $0x38] sm:$0xff] %v529
      %v534 = vld [vmem:[#allocation2 + $0x8] sm:$0xff]
      %v535 = vld [vmem:[#allocation2 + $0x10] sm:$0xff]
      %536 = vst [vmem:[#allocation3 + $0x40] sm:$0xff] %v534
      %537 = vst [vmem:[#allocation3 + $0x48] sm:$0xff] %v535
      %v538 = vld [vmem:[#allocation2 + $0x8] sm:$0xff]
      %v539 = vld [vmem:[#allocation2 + $0x10] sm:$0xff]
      %v540 = vld [vmem:[#allocation2 + $0x18] sm:$0xff]
      %541 = vrot.lane.b32.xlu0 %v473, 1
      %v542 = vpop.permute.xlu0 %541
      %543 = vrot.lane.b32.xlu0 %v474, 1
      %v544 = vpop.permute.xlu0 %543
      %v545 = vsel %vm527, %v542, %v544
      %v549 = vmul.f32 %v538, %v542
      %v550 = vmul.f32 %v539, %v545
      %v551 = vmul.f32 %v540, %v544
      %555 = vrot.lane.b32.xlu0 %v549, 127
      %v556 = vpop.permute.xlu0 %555
      %557 = vrot.lane.b32.xlu0 %v550, 127
      %v558 = vpop.permute.xlu0 %557
      %559 = vrot.lane.b32.xlu0 %v551, 127
      %v560 = vpop.permute.xlu0 %559
      %v561 = vsel %vm510, %v556, %v558
      %v562 = vsel %vm510, %v558, %v560
      %565 = vst [vmem:[#allocation3 + $0x50] sm:$0xff] %v561
      %566 = vst [vmem:[#allocation3 + $0x58] sm:$0xff] %v562
      %v567 = vld [vmem:[#allocation2 + $0x8] sm:$0xff]
      %v568 = vld [vmem:[#allocation2 + $0x10] sm:$0xff]
      %v569 = vld [vmem:[#allocation2 + $0x18] sm:$0xff]
      %570 = vrot.lane.b32.xlu0 %v420, 15
      %v571 = vpop.permute.xlu0 %570
      %572 = vrot.lane.b32.xlu0 %v421, 15
      %v573 = vpop.permute.xlu0 %572
      %v574 = vsel %vm496, %v571, %v573
      %v578 = vmul.f32 %v567, %v571
      %v579 = vmul.f32 %v568, %v574
      %v580 = vmul.f32 %v569, %v573
      %584 = vrot.lane.b32.xlu0 %v578, 113
      %v585 = vpop.permute.xlu0 %584
      %586 = vrot.lane.b32.xlu0 %v579, 113
      %v587 = vpop.permute.xlu0 %586
      %588 = vrot.lane.b32.xlu0 %v580, 113
      %v589 = vpop.permute.xlu0 %588
      %v590 = vsel %vm479, %v585, %v587
      %v591 = vsel %vm479, %v587, %v589
      %594 = vst [vmem:[#allocation3 + $0x60] sm:$0xff] %v590
      %595 = vst [vmem:[#allocation3 + $0x68] sm:$0xff] %v591
      %v596 = vld [vmem:[#allocation2 + $0x8] sm:$0xff]
      %v597 = vld [vmem:[#allocation2 + $0x10] sm:$0xff]
      %v598 = vld [vmem:[#allocation2 + $0x18] sm:$0xff]
      %602 = vrot.lane.b32.xlu0 %v596, 112
      %v603 = vpop.permute.xlu0 %602
      %604 = vrot.lane.b32.xlu0 %v597, 112
      %v605 = vpop.permute.xlu0 %604
      %606 = vrot.lane.b32.xlu0 %v598, 112
      %v607 = vpop.permute.xlu0 %606
      %vm608 = vcmask 916480
      %v609 = vsel %vm608, %v603, %v605
      %v610 = vsel %vm608, %v605, %v607
      %613 = vst [vmem:[#allocation3 + $0x70] sm:$0xff] %v609
      %614 = vst [vmem:[#allocation3 + $0x78] sm:$0xff] %v610
      %v615 = vld [vmem:[#allocation2 + $0x8] sm:$0xff]
      %v616 = vld [vmem:[#allocation2 + $0x10] sm:$0xff]
      %v617 = vld [vmem:[#allocation2 + $0x18] sm:$0xff]
      %618 = vrot.lane.b32.xlu0 %v473, 17
      %v619 = vpop.permute.xlu0 %618
      %620 = vrot.lane.b32.xlu0 %v474, 17
      %v621 = vpop.permute.xlu0 %620
      %v622 = vsel %vm443, %v619, %v621
      %v626 = vmul.f32 %v615, %v619
      %v627 = vmul.f32 %v616, %v622
      %v628 = vmul.f32 %v617, %v621
      %632 = vrot.lane.b32.xlu0 %v626, 111
      %v633 = vpop.permute.xlu0 %632
      %634 = vrot.lane.b32.xlu0 %v627, 111
      %v635 = vpop.permute.xlu0 %634
      %636 = vrot.lane.b32.xlu0 %v628, 111
      %v637 = vpop.permute.xlu0 %636
      %v638 = vsel %vm426, %v633, %v635
      %v639 = vsel %vm426, %v635, %v637
      %642 = vst [vmem:[#allocation3 + $0x80] sm:$0xff] %v638
      %643 = vst [vmem:[#allocation3 + $0x88] sm:$0xff] %v639
      %v644 = vld [vmem:[%s5] sm:$0xff]
      %v645 = vld [vmem:[#allocation3] sm:$0xff]
      %v646 = vld [vmem:[#allocation3 + $0x8] sm:$0xff]
      %v647 = vld [vmem:[#allocation3 + $0x10] sm:$0xff]
      %v648 = vld [vmem:[#allocation3 + $0x18] sm:$0xff]
      %v649 = vld [vmem:[#allocation3 + $0x20] sm:$0xff]
      %v650 = vld [vmem:[#allocation3 + $0x28] sm:$0xff]
      %v651 = vld [vmem:[#allocation3 + $0x30] sm:$0xff]
      %v652 = vld [vmem:[#allocation3 + $0x38] sm:$0xff]
      %v653 = vld [vmem:[#allocation3 + $0x40] sm:$0xff]
      %v654 = vld [vmem:[#allocation3 + $0x48] sm:$0xff]
      %v655 = vld [vmem:[#allocation3 + $0x50] sm:$0xff]
      %v656 = vld [vmem:[#allocation3 + $0x58] sm:$0xff]
      %v657 = vld [vmem:[#allocation3 + $0x60] sm:$0xff]
      %v658 = vld [vmem:[#allocation3 + $0x68] sm:$0xff]
      %v659 = vld [vmem:[#allocation3 + $0x70] sm:$0xff]
      %v660 = vld [vmem:[#allocation3 + $0x78] sm:$0xff]
      %v661 = vld [vmem:[#allocation3 + $0x80] sm:$0xff]
      %v662 = vld [vmem:[#allocation3 + $0x88] sm:$0xff]
      %vm663 = vcmask 588800
      %v665 = vsel %vm663, %v644, 0
      %667 = vmatpush.msra.mxu0 0.0
      %668 = vmatpush.msra.mxu0 0.0
      %669 = vmatpush.msra.mxu0 0.0
      %670 = vmatpush.msra.mxu0 0.0
      %671 = vmatpush.msra.mxu0 0.0
      %672 = vmatpush.msra.mxu0 0.0
      %673 = vmatpush.msra.mxu0 0.0
      %674 = vmatpush.msra.mxu0 %v661
      %675 = vmatpush.msra.mxu0 %v659
      %676 = vmatpush.msra.mxu0 %v657
      %677 = vmatpush.msra.mxu0 %v655
      %678 = vmatpush.msra.mxu0 %v653
      %679 = vmatpush.msra.mxu0 %v651
      %680 = vmatpush.msra.mxu0 %v649
      %681 = vmatpush.msra.mxu0 %v647
      %682 = vmatpush.msra.mxu0 %v645
      %683 = vmatmul.f32.gmra.mxu0 %v665
      %v684 = vpop.f32.mrf.mxu0
      %v685 = vadd.f32 0.0, %v684
      %686 = vdwg.mxu0
      %687 = vmatpush.msra.mxu0 0.0
      %688 = vmatpush.msra.mxu0 0.0
      %689 = vmatpush.msra.mxu0 0.0
      %690 = vmatpush.msra.mxu0 0.0
      %691 = vmatpush.msra.mxu0 0.0
      %692 = vmatpush.msra.mxu0 0.0
      %693 = vmatpush.msra.mxu0 0.0
      %694 = vmatpush.msra.mxu0 %v662
      %695 = vmatpush.msra.mxu0 %v660
      %696 = vmatpush.msra.mxu0 %v658
      %697 = vmatpush.msra.mxu0 %v656
      %698 = vmatpush.msra.mxu0 %v654
      %699 = vmatpush.msra.mxu0 %v652
      %700 = vmatpush.msra.mxu0 %v650
      %701 = vmatpush.msra.mxu0 %v648
      %702 = vmatpush.msra.mxu0 %v646
      %703 = vmatmul.f32.gmra.mxu0 %v665
      %v704 = vpop.f32.mrf.mxu0
      %v705 = vadd.f32 0.0, %v704
      %706 = vdwg.mxu0
      %v707 = vld [vmem:[%s6] sm:$0xff]
      %709 = vset.pattern.permute.xlu0 0
      %710 = vperm.xlu0 %709, %v707
      %v711 = vpop.permute.xlu0 %710
      %v713 = vmul.f32 %v685, %v711
      %v714 = vmul.f32 %v705, %v711
      %v715 = vld [vmem:[%s7] sm:$0xff]
      %717 = vset.pattern.permute.xlu0 0
      %718 = vperm.xlu0 %717, %v715
      %v719 = vpop.permute.xlu0 %718
      %v721 = vadd.f32 %v713, %v719
      %v722 = vadd.f32 %v714, %v719
      %v723 = vxor.u32 %v721, 2147483648
      %v724 = vxor.u32 %v722, 2147483648
      %v725 = vmul.f32 %v723, 1.442695
      %v726 = vpow.pop %v725
      %v727 = vmul.f32 %v724, 1.442695
      %v728 = vpow.pop %v727
      %v729 = vadd.f32 %v726, 1.0
      %v730 = vadd.f32 %v728, 1.0
      %v731 = vrcp.pop %v729
      %v732 = vmul.f32 %v729, %v731
      %v733 = vsub.f32 1.0, %v732
      %v734 = vmul.f32 %v731, %v733
      %v735 = vadd.f32 %v731, %v734
      %vm736 = vweird.f32 %v729
      %vm737 = vweird.f32 %v731
      %vm738 = vmor %vm736, %vm737
      %v739 = vsel %vm738, %v731, %v735
      %v740 = vand.u32 2147483647, %v729
      %vm741 = vcmp.eq.f32.partialorder %v740, 8.507059e+37
      %v742 = vand.u32 %v729, 2147483648
      %v743 = vor.u32 1.1754944e-38, %v742
      %v744 = vsel %vm741, %v743, %v739
      %v745 = vmul.f32 1.0, %v744
      %v746 = vrcp.pop %v730
      %v747 = vmul.f32 %v730, %v746
      %v748 = vsub.f32 1.0, %v747
      %v749 = vmul.f32 %v746, %v748
      %v750 = vadd.f32 %v746, %v749
      %vm751 = vweird.f32 %v730
      %vm752 = vweird.f32 %v746
      %vm753 = vmor %vm751, %vm752
      %v754 = vsel %vm753, %v746, %v750
      %v755 = vand.u32 2147483647, %v730
      %vm756 = vcmp.eq.f32.partialorder %v755, 8.507059e+37
      %v757 = vand.u32 %v730, 2147483648
      %v758 = vor.u32 1.1754944e-38, %v757
      %v759 = vsel %vm756, %v758, %v754
      %v760 = vmul.f32 1.0, %v759
      %v761 = vmul.f32 %v721, %v745
      %v762 = vmul.f32 %v722, %v760
      %v763 = vld [vmem:[%s300] sm:$0xff]
      %v764 = vld [vmem:[%s300 + $0x8] sm:$0xff]
      %v765 = vadd.f32 %v761, %v763
      %v766 = vadd.f32 %v762, %v764
      %767 = vst [vmem:[%s305] sm:$0xff] %v765
      %768 = vst [vmem:[%s305 + $0x8] sm:$0xff] %v766
      %p769 = scmp.lt.s32.totalorder %s19, 1
      %s770 = scalar_select %p769, %s19, 1
      %s771 = smul.addr %s770, 2
      %s772 = smul.addr %s771, 8
      %s773 = scalar_lea.vmem %s8, %s772
      // Predicated region
      $region53: #{bottleneck_forward.1} parent=51 // pred_check
        %p774 = pneg %p210
      $region54: #{bottleneck_forward.1} parent=51 // pred_check_branch
        %776 = sbr.rel (%p774) target = $region56
      $region55: #{bottleneck_forward.1} parent=51 // pred_region
        _
      $region56: #{bottleneck_forward.1} parent=51 // pred_fallthru
        _
    $region52: #{bottleneck_forward.1} parent=5 // pred_fallthru
      _
    %p777 = scmp.le.s32.totalorder 2, %s14
    // Predicated region
    $region57: #{bottleneck_forward.1} parent=5 // pred_check
      %p778 = pneg %p777
    $region58: #{bottleneck_forward.1} parent=5 // pred_check_branch
      %780 = sbr.rel (%p778) target = $region60
    $region59: #{bottleneck_forward.1} parent=5 // pred_region
      %s781 = ssub.s32 %s14, 2
      // Predicated region
      $region61: #{bottleneck_forward.1} parent=59 // pred_check
        %p782 = pneg %p216
      $region62: #{bottleneck_forward.1} parent=59 // pred_check_branch
        %784 = sbr.rel (%p782) target = $region64
      $region63: #{bottleneck_forward.1} parent=59 // pred_region
        %p785 = scmp.lt.s32.totalorder %s20, 1
        %s786 = scalar_select %p785, %s20, 1
        %s787 = smul.addr %s786, 2
        %s788 = smul.addr %s787, 8
        %s789 = scalar_lea.vmem %s8, %s788
      $region64: #{bottleneck_forward.1} parent=59 // pred_fallthru
        _
    $region60: #{bottleneck_forward.1} parent=5 // pred_fallthru
      _
  $region6: #{bottleneck_forward.1} parent=0 // loop_footer
    %s18 = sadd.s32 1, %s14
  $region7: #{bottleneck_forward.1} parent=0 // loop_footer_branch
    %13 = sbr.rel target = $region3
  $region8: #{bottleneck_forward.1} parent=0 // loop_exit
    _

</llo_original>
